<compile_context>
chip_gen: v6e
topology: v6e:2x2x1
jax: 0.10.0
libtpu: 0.0.40
codegen_flags: <defaults>
</compile_context>

<pallas_src>
import functools

import jax
import jax.numpy as jnp
from jax.experimental import pallas as pl
from jax.experimental.pallas import tpu as pltpu


def _round_up(x, m):
    return (x + m - 1) // m * m


def _pad_to(a, shape):
    pads = [(0, t - s) for s, t in zip(a.shape, shape)]
    return jnp.pad(a, pads) if any(p[1] for p in pads) else a


def _vmem_capacity_bytes():
    """Physical per-core VMEM; conservative (v7x) fallback if query fails."""
    try:
        info = pltpu.get_tpu_info()
        cap = getattr(info, "vmem_capacity_bytes", None)
        if cap:
            return int(cap)
    except Exception:
        pass
    return 64 << 20


def _attention_kernel(x_ref, wqkv_ref, wo_ref, bo_ref, o_ref, acc_ref, *,
                      g, dim_head, gwp, n_valid, n_padded, resident, mm_dtype):
    """One (batch, head_group) per grid step; accumulate output proj over groups.

    x_ref:    (Np, Dp)          one batch row-block (squeezed batch dim)
    wqkv_ref: (G, Dp, 3*GWp)    resident fused q|k|v weights (or (Dp, 3*GWp) tiled)
    wo_ref:   (G, GWp, Dp)      resident output-proj slices   (or (GWp, Dp) tiled)
    bo_ref:   (1, Dp)           output projection bias
    o_ref:    (Np, Dp)          written on the last group
    acc_ref:  (Np, Dp) f32      accumulates sum_h head_out_h @ Wo_h
    """
    grp = pl.program_id(1)

    @pl.when(grp == 0)
    def _init():
        acc_ref[...] = jnp.zeros_like(acc_ref)

    x = x_ref[...]
    wqkv = wqkv_ref[grp] if resident else wqkv_ref[...]   # (Dp, 3*GWp)
    wo = wo_ref[grp] if resident else wo_ref[...]         # (GWp, Dp)

    # Fused QKV projection for the whole head group: one wide-RHS MXU matmul.
    # (The softmax scale is pre-folded into the q weight columns.)
    qkv = jnp.dot(x.astype(mm_dtype), wqkv.astype(mm_dtype),
                  preferred_element_type=jnp.float32)      # (Np, 3*GWp)

    q_win = qkv[:, :gwp]            # 128-aligned lane slices (GWp % 128 == 0)
    k_win = qkv[:, gwp:2 * gwp]
    v_win = qkv[:, 2 * gwp:]

    per_head_mask = not (g == 1 and dim_head == gwp)
    if per_head_mask:
        lane = jax.lax.broadcasted_iota(jnp.int32, (q_win.shape[0], gwp), 1)

    group_out = jnp.zeros_like(q_win)                      # (Np, GWp) f32
    for j in range(g):
        if per_head_mask:
            sel = (lane >= j * dim_head) & (lane < (j + 1) * dim_head)
            q_j = jnp.where(sel, q_win, 0.0)
        else:
            q_j = q_win

        # Per-head scores: other heads' lanes are zero in q_j, so the full
        # GWp-wide contraction is exactly q_j . k_j (scaled).
        dots = jax.lax.dot_general(
            q_j.astype(mm_dtype), k_win.astype(mm_dtype),
            (((1,), (1,)), ((), ())),
            preferred_element_type=jnp.float32)            # (Np, Np)

        # Key-padding mask only when the sequence was actually padded.
        if n_valid != n_padded:
            col = jax.lax.broadcasted_iota(jnp.int32, dots.shape, 1)
            dots = jnp.where(col < n_valid, dots, -1e30)

        # Numerically-stable softmax with deferred normalization.
        m = jnp.max(dots, axis=-1, keepdims=True)
        p = jnp.exp(dots - m)
        l = jnp.sum(p, axis=-1, keepdims=True)
        inv_l = 1.0 / l                                    # (Np, 1)

        pv = jnp.dot(p.astype(mm_dtype), v_win.astype(mm_dtype),
                     preferred_element_type=jnp.float32)   # (Np, GWp)
        contrib = pv * inv_l
        if per_head_mask:
            contrib = jnp.where(sel, contrib, 0.0)         # keep head j's lanes
        group_out = group_out + contrib

    # This group's slice of the output projection, accumulated across groups.
    acc_ref[...] += jnp.dot(group_out.astype(mm_dtype), wo.astype(mm_dtype),
                            preferred_element_type=jnp.float32)   # (Np, Dp)

    @pl.when(grp == pl.num_programs(1) - 1)
    def _finalize():
        o_ref[...] = (acc_ref[...] +
                      bo_ref[...].astype(jnp.float32)).astype(o_ref.dtype)


def self_attention(x, w_qkv, w_out=None, b_out=None, *, heads=8, dim_head=64,
                   use_bf16_matmul=False):
    """x: (B, N, D).
    w_qkv: (D, 3*heads*dim_head), laid out so qkv = x @ w_qkv
           (== torch to_qkv.weight.T).
    w_out: (heads*dim_head, D) (== torch to_out[0].weight.T), or None when
           project_out is False (heads==1 and dim_head==dim) -> identity.
    b_out: (D,) or None.
    use_bf16_matmul: cast MXU operands to bf16 (f32 accumulation) — mainly for
           v5e where f32 matmul is emulated.  Off by default for accuracy.
    Returns (B, N, D)."""
    B, N, D = x.shape
    inner = heads * dim_head
    assert w_qkv.shape == (D, 3 * inner)
    scale = float(dim_head) ** -0.5

    if w_out is None:            # project_out == False -> nn.Identity()
        assert inner == D
        w_out = jnp.eye(D, dtype=x.dtype)
    if b_out is None:
        b_out = jnp.zeros((D,), dtype=x.dtype)

    # ---- head grouping: pack g heads so g*dim_head is lane-dense (128) ----
    if dim_head % 128 == 0:
        g = 1
    else:
        g = max(1, min(heads, 128 // max(dim_head, 1)))
    Hg = _round_up(heads, g)           # zero-padded heads contribute exactly 0
    groups = Hg // g
    GW = g * dim_head
    GWp = _round_up(GW, 128)

    # ---- padding: lane-dense feature axes, sublane-multiple sequence axis ----
    sub = 8 if jnp.dtype(x.dtype).itemsize >= 4 else 16
    Np = _round_up(N, sub)
    Dp = _round_up(D, 128)

    xp = _pad_to(x, (B, Np, Dp))

    # Split Wqkv, fold the softmax scale into Wq, regroup per head-group with
    # fused q|k|v lane sections of width GWp each (128-aligned).
    wq, wk, wv = jnp.split(w_qkv, 3, axis=-1)                      # (D, inner)
    wq = (wq.astype(jnp.float32) * scale).astype(w_qkv.dtype)      # fold scale

    def per_group(w):                               # (D, inner) -> (G, Dp, GWp)
        w = w.reshape(D, heads, dim_head)
        w = _pad_to(w, (D, Hg, dim_head))
        w = w.reshape(D, groups, g * dim_head).transpose(1, 0, 2)  # (G, D, GW)
        return _pad_to(w, (groups, Dp, GWp))

    wqkv_g = jnp.concatenate([per_group(wq), per_group(wk), per_group(wv)],
                             axis=-1)               # (G, Dp, 3*GWp)

    wo = _pad_to(w_out.reshape(heads, dim_head, D), (Hg, dim_head, D))
    wo_g = _pad_to(wo.reshape(groups, g * dim_head, D), (groups, GWp, Dp))

    bo = _pad_to(b_out.reshape(1, D), (1, Dp))

    mm_dtype = (jnp.bfloat16 if (use_bf16_matmul and x.dtype == jnp.float32)
                else x.dtype)

    # ---- weight residency + scoped VMEM budget (per-generation aware) ----
    itx = jnp.dtype(x.dtype).itemsize
    itw = jnp.dtype(w_qkv.dtype).itemsize
    w_bytes = groups * (Dp * 3 * GWp + GWp * Dp) * itw
    resident = (2 * w_bytes) <= (24 << 20)          # fits comfortably on all gens

    vmem_cap = int(_vmem_capacity_bytes() * 0.8)    # leave compiler headroom
    w_buf = 2 * w_bytes if resident else 2 * (Dp * 3 * GWp + GWp * Dp) * itw
    need = (4 * Np * Dp * itx                       # x + out blocks (double buffered)
            + w_buf
            + 2 * Dp * itw                          # bias
            + 4 * Np * Dp                           # f32 accumulator scratch
            + 4 * (3 * Np * GWp + 3 * Np * Np + 2 * Np * GWp + Np * Dp)  # f32 temps
            + (8 << 20))                            # slack
    vmem_limit = min(max(need, 32 << 20), vmem_cap)

    kernel = functools.partial(
        _attention_kernel, g=g, dim_head=dim_head, gwp=GWp,
        n_valid=N, n_padded=Np, resident=resident, mm_dtype=mm_dtype)

    if resident:
        # Full-extent blocks, constant index_map -> weights DMA'd once, stay in VMEM.
        wqkv_spec = pl.BlockSpec((groups, Dp, 3 * GWp), lambda b, grp: (0, 0, 0))
        wo_spec = pl.BlockSpec((groups, GWp, Dp), lambda b, grp: (0, 0, 0))
    else:
        wqkv_spec = pl.BlockSpec((None, Dp, 3 * GWp), lambda b, grp: (grp, 0, 0))
        wo_spec = pl.BlockSpec((None, GWp, Dp), lambda b, grp: (grp, 0, 0))

    out = pl.pallas_call(
        kernel,
        out_shape=jax.ShapeDtypeStruct((B, Np, Dp), x.dtype),
        grid_spec=pltpu.PrefetchScalarGridSpec(
            num_scalar_prefetch=0,
            grid=(B, groups),                      # head-group axis = reduction, last
            in_specs=[
                pl.BlockSpec((None, Np, Dp), lambda b, grp: (b, 0, 0)),   # x
                wqkv_spec,                                                # Wqkv (fused)
                wo_spec,                                                  # Wo
                pl.BlockSpec((1, Dp), lambda b, grp: (0, 0)),             # b_out
            ],
            out_specs=pl.BlockSpec((None, Np, Dp), lambda b, grp: (b, 0, 0)),
            scratch_shapes=[pltpu.VMEM((Np, Dp), jnp.float32)],
        ),
        compiler_params=pltpu.CompilerParams(
            dimension_semantics=("parallel", "arbitrary"),
            vmem_limit_bytes=int(vmem_limit)),
    )(xp, wqkv_g, wo_g, bo)

    return out[:, :N, :D]


def reference(x, w_qkv, w_out, b_out, *, heads, dim_head):
    """Pure-JAX reference matching the PyTorch SelfAttention forward."""
    B, N, D = x.shape
    inner = heads * dim_head
    qkv = x.astype(jnp.float32) @ w_qkv.astype(jnp.float32)
    q, k, v = jnp.split(qkv, 3, axis=-1)

    def split_heads(t):
        return t.reshape(B, N, heads, dim_head).transpose(0, 2, 1, 3)  # b h n d

    q, k, v = map(split_heads, (q, k, v))
    dots = jnp.einsum("bhid,bhjd->bhij", q, k) * (dim_head ** -0.5)
    attn = jax.nn.softmax(dots, axis=-1)
    out = jnp.einsum("bhij,bhjd->bhid", attn, v)
    out = out.transpose(0, 2, 1, 3).reshape(B, N, inner)
    return (out @ w_out.astype(jnp.float32) +
            b_out.astype(jnp.float32)).astype(x.dtype)


if __name__ == "__main__":
    key = jax.random.PRNGKey(0)
    B, N, D = 2, 8, 32              # batch=2, seq=8, hidden=32
    heads, dim_head = 8, 64         # module defaults -> project_out=True
    inner = heads * dim_head

    kx, kqkv, kwo, kbo = jax.random.split(key, 4)
    x = jax.random.normal(kx, (B, N, D), dtype=jnp.float32)
    # Weights stored so that y = x @ W (i.e. W == torch_linear.weight.T)
    w_qkv = jax.random.normal(kqkv, (D, 3 * inner), jnp.float32) * (1.0 / D ** 0.5)
    w_out = jax.random.normal(kwo, (inner, D), jnp.float32) * (1.0 / inner ** 0.5)
    b_out = jax.random.normal(kbo, (D,), jnp.float32) * 0.1

    out = self_attention(x, w_qkv, w_out, b_out, heads=heads, dim_head=dim_head)
    out = jax.block_until_ready(out)

    ref = reference(x, w_qkv, w_out, b_out, heads=heads, dim_head=dim_head)
    assert out.shape == (B, N, D)
    assert jnp.allclose(out, ref, atol=2e-4, rtol=2e-4), "mismatch vs reference"

    print("KERNEL_OK")
</pallas_src>

<mosaic_0001>
module attributes {stable_mosaic.version = 11 : i64} {
  func.func @_attention_kernel(%arg0: i32, %arg1: i32, %arg2: memref<1x8x128xf32, #tpu.memory_space<vmem>>, %arg3: memref<4x128x384xf32, #tpu.memory_space<vmem>>, %arg4: memref<4x128x128xf32, #tpu.memory_space<vmem>>, %arg5: memref<1x128xf32, #tpu.memory_space<vmem>>, %arg6: memref<1x8x128xf32, #tpu.memory_space<vmem>>, %arg7: memref<8x128xf32, #tpu.memory_space<vmem>>) attributes {dimension_semantics = [#tpu.dimension_semantics<parallel>, #tpu.dimension_semantics<arbitrary>], iteration_bounds = array<i64: 2, 4>, scalar_prefetch = 0 : i64, scratch_operands = 1 : i64, tpu.core_type = #tpu.core_type<tc>, window_params = [{transform_indices = @transform_0, window_bounds = array<i64: 1, 8, 128>}, {pipeline_mode = #tpu.pipeline_mode<synchronous>, transform_indices = @transform_1, window_bounds = array<i64: 4, 128, 384>}, {pipeline_mode = #tpu.pipeline_mode<synchronous>, transform_indices = @transform_2, window_bounds = array<i64: 4, 128, 128>}, {pipeline_mode = #tpu.pipeline_mode<synchronous>, transform_indices = @transform_3, window_bounds = array<i64: 1, 128>}, {transform_indices = @transform_4, window_bounds = array<i64: 1, 8, 128>}]} {
    %c0_i32 = arith.constant 0 : i32
    %0 = arith.cmpi eq, %arg1, %c0_i32 : i32
    %1 = arith.extui %0 : i1 to i32
    %c0_i32_0 = arith.constant 0 : i32
    %2 = arith.cmpi ne, %1, %c0_i32_0 : i32
    scf.if %2 {
      %cst_30 = arith.constant 0.000000e+00 : f32
      %70 = vector.broadcast %cst_30 : f32 to vector<8x128xf32>
      %c0_31 = arith.constant 0 : index
      %c0_32 = arith.constant 0 : index
      %71 = vector.load %arg7[%c0_31, %c0_32] : memref<8x128xf32, #tpu.memory_space<vmem>>, vector<8x128xf32>
      tpu.vector_store %arg7[%c0_31, %c0_32], %70 {strides = array<i32>} : memref<8x128xf32, #tpu.memory_space<vmem>>, vector<8x128xf32>,
    } else {
    }
    %c0 = arith.constant 0 : index
    %c0_1 = arith.constant 0 : index
    %c0_2 = arith.constant 0 : index
    %3 = vector.load %arg2[%c0, %c0_1, %c0_2] : memref<1x8x128xf32, #tpu.memory_space<vmem>>, vector<1x8x128xf32>
    %4 = vector.shape_cast %3 : vector<1x8x128xf32> to vector<8x128xf32>
    %5 = arith.index_cast %arg1 : i32 to index
    %c0_3 = arith.constant 0 : index
    %c0_4 = arith.constant 0 : index
    %6 = vector.load %arg3[%5, %c0_3, %c0_4] : memref<4x128x384xf32, #tpu.memory_space<vmem>>, vector<1x128x384xf32>
    %7 = vector.shape_cast %6 : vector<1x128x384xf32> to vector<128x384xf32>
    %8 = arith.index_cast %arg1 : i32 to index
    %c0_5 = arith.constant 0 : index
    %c0_6 = arith.constant 0 : index
    %9 = vector.load %arg4[%8, %c0_5, %c0_6] : memref<4x128x128xf32, #tpu.memory_space<vmem>>, vector<1x128x128xf32>
    %10 = vector.shape_cast %9 : vector<1x128x128xf32> to vector<128x128xf32>
    %cst = arith.constant dense<0.000000e+00> : vector<8x384xf32>
    %11 = tpu.matmul %4, %7, %cst {dimension_numbers = #tpu.dot_dimension_numbers<[1], [0], [0], [1], [0, 0, 1, 1], [], []>} : vector<8x128xf32>, vector<128x384xf32>, vector<8x384xf32> -> vector<8x384xf32>
    %12 = vector.extract_strided_slice %11 {offsets = [0, 0], sizes = [8, 128], strides = [1, 1]} : vector<8x384xf32> to vector<8x128xf32>
    %13 = vector.extract_strided_slice %11 {offsets = [0, 128], sizes = [8, 128], strides = [1, 1]} : vector<8x384xf32> to vector<8x128xf32>
    %14 = vector.extract_strided_slice %11 {offsets = [0, 256], sizes = [8, 128], strides = [1, 1]} : vector<8x384xf32> to vector<8x128xf32>
    %15 = tpu.iota {dimensions = array<i32: 1>} : vector<8x128xi32>
    %cst_7 = arith.constant 0.000000e+00 : f32
    %16 = vector.broadcast %cst_7 : f32 to vector<8x128xf32>
    %c0_i32_8 = arith.constant 0 : i32
    %17 = vector.broadcast %c0_i32_8 : i32 to vector<8x128xi32>
    %18 = arith.cmpi sge, %15, %17 : vector<8x128xi32>
    %c64_i32 = arith.constant 64 : i32
    %19 = vector.broadcast %c64_i32 : i32 to vector<8x128xi32>
    %20 = arith.cmpi slt, %15, %19 : vector<8x128xi32>
    %21 = arith.andi %18, %20 : vector<8x128xi1>
    %cst_9 = arith.constant 0.000000e+00 : f32
    %22 = vector.broadcast %cst_9 : f32 to vector<8x128xf32>
    %23 = arith.select %21, %12, %22 : vector<8x128xi1>, vector<8x128xf32>
    %cst_10 = arith.constant dense<0.000000e+00> : vector<8x8xf32>
    %24 = tpu.matmul %23, %13, %cst_10 {dimension_numbers = #tpu.dot_dimension_numbers<[1], [1], [0], [0], [0, 0, 1, 0], [], []>} : vector<8x128xf32>, vector<8x128xf32>, vector<8x8xf32> -> vector<8x8xf32>
    %cst_11 = arith.constant dense<0xFF800000> : vector<8xf32>
    %25 = vector.multi_reduction <maximumf>, %24, %cst_11 [1] : vector<8x8xf32> to vector<8xf32>
    %26 = vector.shape_cast %25 : vector<8xf32> to vector<8x1xf32>
    %27 = vector.broadcast %26 : vector<8x1xf32> to vector<8x8xf32>
    %28 = arith.subf %24, %27 : vector<8x8xf32>
    %29 = math.exp %28 : vector<8x8xf32>
    %cst_12 = arith.constant dense<0.000000e+00> : vector<8xf32>
    %30 = vector.multi_reduction <add>, %29, %cst_12 [1] : vector<8x8xf32> to vector<8xf32>
    %31 = vector.shape_cast %30 : vector<8xf32> to vector<8x1xf32>
    %cst_13 = arith.constant 1.000000e+00 : f32
    %32 = vector.broadcast %cst_13 : f32 to vector<8x1xf32>
    %33 = arith.divf %32, %31 : vector<8x1xf32>
    %cst_14 = arith.constant dense<0.000000e+00> : vector<8x128xf32>
    %34 = tpu.matmul %29, %14, %cst_14 {dimension_numbers = #tpu.dot_dimension_numbers<[1], [0], [0], [1], [0, 0, 1, 1], [], []>} : vector<8x8xf32>, vector<8x128xf32>, vector<8x128xf32> -> vector<8x128xf32>
    %35 = vector.broadcast %33 : vector<8x1xf32> to vector<8x128xf32>
    %36 = arith.mulf %34, %35 : vector<8x128xf32>
    %cst_15 = arith.constant 0.000000e+00 : f32
    %37 = vector.broadcast %cst_15 : f32 to vector<8x128xf32>
    %38 = arith.select %21, %36, %37 : vector<8x128xi1>, vector<8x128xf32>
    %39 = arith.addf %16, %38 : vector<8x128xf32>
    %c64_i32_16 = arith.constant 64 : i32
    %40 = vector.broadcast %c64_i32_16 : i32 to vector<8x128xi32>
    %41 = arith.cmpi sge, %15, %40 : vector<8x128xi32>
    %c128_i32 = arith.constant 128 : i32
    %42 = vector.broadcast %c128_i32 : i32 to vector<8x128xi32>
    %43 = arith.cmpi slt, %15, %42 : vector<8x128xi32>
    %44 = arith.andi %41, %43 : vector<8x128xi1>
    %cst_17 = arith.constant 0.000000e+00 : f32
    %45 = vector.broadcast %cst_17 : f32 to vector<8x128xf32>
    %46 = arith.select %44, %12, %45 : vector<8x128xi1>, vector<8x128xf32>
    %cst_18 = arith.constant dense<0.000000e+00> : vector<8x8xf32>
    %47 = tpu.matmul %46, %13, %cst_18 {dimension_numbers = #tpu.dot_dimension_numbers<[1], [1], [0], [0], [0, 0, 1, 0], [], []>} : vector<8x128xf32>, vector<8x128xf32>, vector<8x8xf32> -> vector<8x8xf32>
    %cst_19 = arith.constant dense<0xFF800000> : vector<8xf32>
    %48 = vector.multi_reduction <maximumf>, %47, %cst_19 [1] : vector<8x8xf32> to vector<8xf32>
    %49 = vector.shape_cast %48 : vector<8xf32> to vector<8x1xf32>
    %50 = vector.broadcast %49 : vector<8x1xf32> to vector<8x8xf32>
    %51 = arith.subf %47, %50 : vector<8x8xf32>
    %52 = math.exp %51 : vector<8x8xf32>
    %cst_20 = arith.constant dense<0.000000e+00> : vector<8xf32>
    %53 = vector.multi_reduction <add>, %52, %cst_20 [1] : vector<8x8xf32> to vector<8xf32>
    %54 = vector.shape_cast %53 : vector<8xf32> to vector<8x1xf32>
    %cst_21 = arith.constant 1.000000e+00 : f32
    %55 = vector.broadcast %cst_21 : f32 to vector<8x1xf32>
    %56 = arith.divf %55, %54 : vector<8x1xf32>
    %cst_22 = arith.constant dense<0.000000e+00> : vector<8x128xf32>
    %57 = tpu.matmul %52, %14, %cst_22 {dimension_numbers = #tpu.dot_dimension_numbers<[1], [0], [0], [1], [0, 0, 1, 1], [], []>} : vector<8x8xf32>, vector<8x128xf32>, vector<8x128xf32> -> vector<8x128xf32>
    %58 = vector.broadcast %56 : vector<8x1xf32> to vector<8x128xf32>
    %59 = arith.mulf %57, %58 : vector<8x128xf32>
    %cst_23 = arith.constant 0.000000e+00 : f32
    %60 = vector.broadcast %cst_23 : f32 to vector<8x128xf32>
    %61 = arith.select %44, %59, %60 : vector<8x128xi1>, vector<8x128xf32>
    %62 = arith.addf %39, %61 : vector<8x128xf32>
    %c0_24 = arith.constant 0 : index
    %c0_25 = arith.constant 0 : index
    %63 = vector.load %arg7[%c0_24, %c0_25] : memref<8x128xf32, #tpu.memory_space<vmem>>, vector<8x128xf32>
    %cst_26 = arith.constant dense<0.000000e+00> : vector<8x128xf32>
    %64 = tpu.matmul %62, %10, %cst_26 {dimension_numbers = #tpu.dot_dimension_numbers<[1], [0], [0], [1], [0, 0, 1, 1], [], []>} : vector<8x128xf32>, vector<128x128xf32>, vector<8x128xf32> -> vector<8x128xf32>
    %65 = arith.addf %63, %64 : vector<8x128xf32>
    %c0_27 = arith.constant 0 : index
    %c0_28 = arith.constant 0 : index
    %66 = vector.load %arg7[%c0_27, %c0_28] : memref<8x128xf32, #tpu.memory_space<vmem>>, vector<8x128xf32>
    tpu.vector_store %arg7[%c0_27, %c0_28], %65 {strides = array<i32>} : memref<8x128xf32, #tpu.memory_space<vmem>>, vector<8x128xf32>,
    %c3_i32 = arith.constant 3 : i32
    %67 = arith.cmpi eq, %arg1, %c3_i32 : i32
    %68 = arith.extui %67 : i1 to i32
    %c0_i32_29 = arith.constant 0 : i32
    %69 = arith.cmpi ne, %68, %c0_i32_29 : i32
    scf.if %69 {
      %c0_30 = arith.constant 0 : index
      %c0_31 = arith.constant 0 : index
      %70 = vector.load %arg7[%c0_30, %c0_31] : memref<8x128xf32, #tpu.memory_space<vmem>>, vector<8x128xf32>
      %c0_32 = arith.constant 0 : index
      %c0_33 = arith.constant 0 : index
      %71 = vector.load %arg5[%c0_32, %c0_33] : memref<1x128xf32, #tpu.memory_space<vmem>>, vector<1x128xf32>
      %72 = vector.broadcast %71 : vector<1x128xf32> to vector<8x128xf32>
      %73 = arith.addf %70, %72 : vector<8x128xf32>
      %c0_34 = arith.constant 0 : index
      %c0_35 = arith.constant 0 : index
      %c0_36 = arith.constant 0 : index
      %74 = vector.load %arg6[%c0_34, %c0_35, %c0_36] : memref<1x8x128xf32, #tpu.memory_space<vmem>>, vector<1x8x128xf32>
      %75 = vector.shape_cast %74 : vector<1x8x128xf32> to vector<8x128xf32>
      %76 = vector.shape_cast %73 : vector<8x128xf32> to vector<1x8x128xf32>
      tpu.vector_store %arg6[%c0_34, %c0_35, %c0_36], %76 {strides = array<i32>} : memref<1x8x128xf32, #tpu.memory_space<vmem>>, vector<1x8x128xf32>,
    } else {
    }
    return
  }
  func.func @transform_0(%arg0: i32, %arg1: i32) -> (i32, i32, i32) {
    %c0_i32 = arith.constant 0 : i32
    %c0_i32_0 = arith.constant 0 : i32
    %c0_i32_1 = arith.constant 0 : i32
    return %arg0, %c0_i32, %c0_i32_0 : i32, i32, i32
  }
  func.func @transform_1(%arg0: i32, %arg1: i32) -> (i32, i32, i32) {
    %c0_i32 = arith.constant 0 : i32
    %c0_i32_0 = arith.constant 0 : i32
    %c0_i32_1 = arith.constant 0 : i32
    %c0_i32_2 = arith.constant 0 : i32
    return %c0_i32, %c0_i32_0, %c0_i32_1 : i32, i32, i32
  }
  func.func @transform_2(%arg0: i32, %arg1: i32) -> (i32, i32, i32) {
    %c0_i32 = arith.constant 0 : i32
    %c0_i32_0 = arith.constant 0 : i32
    %c0_i32_1 = arith.constant 0 : i32
    %c0_i32_2 = arith.constant 0 : i32
    return %c0_i32, %c0_i32_0, %c0_i32_1 : i32, i32, i32
  }
  func.func @transform_3(%arg0: i32, %arg1: i32) -> (i32, i32) {
    %c0_i32 = arith.constant 0 : i32
    %c0_i32_0 = arith.constant 0 : i32
    %c0_i32_1 = arith.constant 0 : i32
    return %c0_i32, %c0_i32_0 : i32, i32
  }
  func.func @transform_4(%arg0: i32, %arg1: i32) -> (i32, i32, i32) {
    %c0_i32 = arith.constant 0 : i32
    %c0_i32_0 = arith.constant 0 : i32
    %c0_i32_1 = arith.constant 0 : i32
    return %arg0, %c0_i32, %c0_i32_0 : i32, i32, i32
  }
}

</mosaic_0001>

<llo_original>
// kernel: tpu_custom_call.1
$region0: #{tpu_custom_call.1}
  #allocation0 [shape = 'u32[]', space=smem, size = 0x4, offset = 0x4, fixed_abs, tag = 'smem constant byte address 0x4 - core index']
  #allocation1 [shape = 'u32[144,128]{1,0:T(1,128)}', space=vmem, size = 0x12000, scoped, tag = 'internal scratch']
  #allocation2 [shape = 'f32[8,128]{1,0:T(8,128)}', space=vmem, size = 0x1000, scoped, tag = 'scratch operand']
  %s0 = inlined_call_operand.hbm [shape: f32[2,8,128], index: 0, kind: input, shape index: {}]
  %s1 = inlined_call_operand.hbm [shape: f32[4,128,384], index: 1, kind: input, shape index: {}]
  %s2 = inlined_call_operand.hbm [shape: f32[4,128,128], index: 2, kind: input, shape index: {}]
  %s3 = inlined_call_operand.vmem [shape: f32[1,128], index: 3, kind: input, shape index: {}]
  %s4 = inlined_call_operand.hbm [shape: f32[2,8,128], index: 4, kind: output, shape index: {}]
  %s5 = sld [smem:[#allocation0]]
  $region69: #{tpu_custom_call.1} parent=0
    _
  %s7 = ssub.s32 1, %s5
  %s8 = scalar_select 0, %s7, %s5
  $region1: #{tpu_custom_call.1} parent=0
    #allocation3 [shape = 'u8[8192]{0}', space=vmem, size = 0x2000, scoped, tag = 'input window, operand 0']
    #allocation4 [shape = 's32[2]{0}', space=sflag, size = 0x8, scoped, tag = 'scoped memory for tpu_custom_call.1']
    #allocation5 [shape = 's32[2]{0}', space=sflag, size = 0x8, scoped, tag = 'scoped memory for tpu_custom_call.1']
    #allocation6 [shape = 'u8[786432]{0}', space=vmem, size = 0xc0000, scoped, tag = 'input window, operand 1, single buffered']
    #allocation7 [shape = 's32[1]{0}', space=sflag, size = 0x4, scoped, tag = 'scoped memory for tpu_custom_call.1']
    #allocation8 [shape = 'u8[262144]{0}', space=vmem, size = 0x40000, scoped, tag = 'input window, operand 2, single buffered']
    #allocation9 [shape = 'u8[8192]{0}', space=vmem, size = 0x2000, scoped, tag = 'output window, operand 0']
    %9 = vsyncpa [#allocation4], 0
    %s10 = scalar_lea.sflag [#allocation4], 1
    %11 = vsyncpa %s10, 0
    %12 = vsyncpa [#allocation7], 0
    %13 = vsyncpa [#allocation5], 0
    %s14 = scalar_lea.sflag [#allocation5], 1
    %15 = vsyncpa %s14, 0
    loop: start=0, step=1, limit=10
    $region2: #{tpu_custom_call.1} parent=1 // loop_pre_header
      _
    $region3: #{tpu_custom_call.1} parent=1 // loop_header
      %s17 = sphi 0, %s21
      %p18 = scmp.ge.s32.totalorder %s17, 10
      %s24 = sphi 0, %s36
      %s25 = sphi 0, %s32
      %s26 = sphi 0, %s24
      %s27 = sphi 0, %s25
      %s28 = sphi 0, %s26
      %s29 = sphi 0, %s27
      %s39 = sphi 0, %s41
      %s42 = sphi 0, %s39
      %s43 = sphi 0, %s42
      %s59 = sphi 0, %s43
      %s63 = sphi 0, %s63
      %s65 = sphi 0, %s63
      %s66 = sphi 0, %s65
      %s80 = sphi 0, %s66
      %s84 = sphi 0, %s84
      %s86 = sphi 0, %s84
      %s87 = sphi 0, %s86
      %s101 = sphi 0, %s87
      %s105 = sphi 0, %s105
      %s107 = sphi 0, %s105
      %s108 = sphi 0, %s107
      %s122 = sphi 0, %s108
      %s128 = sphi 0, %s130
      %s131 = sphi 0, %s128
      %s132 = sphi 0, %s131
      %s148 = sphi 0, %s132
    $region4: #{tpu_custom_call.1} parent=1 // loop_header_branch
      %20 = sbr.rel (%p18) target = $region8
    $region5: #{tpu_custom_call.1} parent=1 // loop_body
      %s22 = ssub.s32 %s17, 1
      %s23 = ssub.s32 %s17, 2
      %s30 = sadd.s32 1, %s25
      %p31 = scmp.ge.s32.totalorder %s30, 4
      %s32 = scalar_select %p31, 0, %s30
      %s33 = sadd.s32 1, %s24
      %s34 = scalar_select %p31, %s33, %s24
      %p35 = scmp.ge.s32.totalorder %s34, 2
      %s36 = scalar_select %p35, 0, %s34
      %s37 = ssub.s32 %s24, %s36
      %p38 = scmp.eq.s32.totalorder %s37, 0
      %s40 = sadd.s32 %s39, 1
      %s41 = scalar_select %p38, %s39, %s40
      %p44 = pneg %p38
      %p45 = scmp.eq.s32.totalorder %s17, 7
      %p46 = por %p44, %p45
      %p47 = scmp.ne.s32.totalorder %s39, %s42
      %p48 = scmp.eq.s32.totalorder %s17, 0
      %p49 = por %p47, %p48
      %p50 = scmp.ne.s32.totalorder %s39, %s42
      %p51 = scmp.eq.s32.totalorder %s22, 7
      %p52 = por %p50, %p51
      %p53 = scmp.ne.s32.totalorder %s42, %s43
      %p54 = scmp.eq.s32.totalorder %s22, 0
      %p55 = por %p53, %p54
      %p56 = scmp.ne.s32.totalorder %s42, %s43
      %p57 = scmp.eq.s32.totalorder %s23, 7
      %p58 = por %p56, %p57
      %p60 = scmp.ne.s32.totalorder %s43, %s59
      %p61 = scmp.eq.s32.totalorder %s23, 0
      %p62 = por %p60, %p61
      %s64 = sadd.s32 %s63, 1
      %p67 = scmp.eq.s32.totalorder %s17, 7
      %p68 = scmp.ne.s32.totalorder %s63, %s65
      %p69 = scmp.eq.s32.totalorder %s17, 0
      %p70 = por %p68, %p69
      %p71 = scmp.ne.s32.totalorder %s63, %s65
      %p72 = scmp.eq.s32.totalorder %s22, 7
      %p73 = por %p71, %p72
      %p74 = scmp.ne.s32.totalorder %s65, %s66
      %p75 = scmp.eq.s32.totalorder %s22, 0
      %p76 = por %p74, %p75
      %p77 = scmp.ne.s32.totalorder %s65, %s66
      %p78 = scmp.eq.s32.totalorder %s23, 7
      %p79 = por %p77, %p78
      %p81 = scmp.ne.s32.totalorder %s66, %s80
      %p82 = scmp.eq.s32.totalorder %s23, 0
      %p83 = por %p81, %p82
      %s85 = sadd.s32 %s84, 1
      %p88 = scmp.eq.s32.totalorder %s17, 7
      %p89 = scmp.ne.s32.totalorder %s84, %s86
      %p90 = scmp.eq.s32.totalorder %s17, 0
      %p91 = por %p89, %p90
      %p92 = scmp.ne.s32.totalorder %s84, %s86
      %p93 = scmp.eq.s32.totalorder %s22, 7
      %p94 = por %p92, %p93
      %p95 = scmp.ne.s32.totalorder %s86, %s87
      %p96 = scmp.eq.s32.totalorder %s22, 0
      %p97 = por %p95, %p96
      %p98 = scmp.ne.s32.totalorder %s86, %s87
      %p99 = scmp.eq.s32.totalorder %s23, 7
      %p100 = por %p98, %p99
      %p102 = scmp.ne.s32.totalorder %s87, %s101
      %p103 = scmp.eq.s32.totalorder %s23, 0
      %p104 = por %p102, %p103
      %s106 = sadd.s32 %s105, 1
      %p109 = scmp.eq.s32.totalorder %s17, 7
      %p110 = scmp.ne.s32.totalorder %s105, %s107
      %p111 = scmp.eq.s32.totalorder %s17, 0
      %p112 = por %p110, %p111
      %p113 = scmp.ne.s32.totalorder %s105, %s107
      %p114 = scmp.eq.s32.totalorder %s22, 7
      %p115 = por %p113, %p114
      %p116 = scmp.ne.s32.totalorder %s107, %s108
      %p117 = scmp.eq.s32.totalorder %s22, 0
      %p118 = por %p116, %p117
      %p119 = scmp.ne.s32.totalorder %s107, %s108
      %p120 = scmp.eq.s32.totalorder %s23, 7
      %p121 = por %p119, %p120
      %p123 = scmp.ne.s32.totalorder %s108, %s122
      %p124 = scmp.eq.s32.totalorder %s23, 0
      %p125 = por %p123, %p124
      %s126 = ssub.s32 %s24, %s36
      %p127 = scmp.eq.s32.totalorder %s126, 0
      %s129 = sadd.s32 %s128, 1
      %s130 = scalar_select %p127, %s128, %s129
      %p133 = pneg %p127
      %p134 = scmp.eq.s32.totalorder %s17, 7
      %p135 = por %p133, %p134
      %p136 = scmp.ne.s32.totalorder %s128, %s131
      %p137 = scmp.eq.s32.totalorder %s17, 0
      %p138 = por %p136, %p137
      %p139 = scmp.ne.s32.totalorder %s128, %s131
      %p140 = scmp.eq.s32.totalorder %s22, 7
      %p141 = por %p139, %p140
      %p142 = scmp.ne.s32.totalorder %s131, %s132
      %p143 = scmp.eq.s32.totalorder %s22, 0
      %p144 = por %p142, %p143
      %p145 = scmp.ne.s32.totalorder %s131, %s132
      %p146 = scmp.eq.s32.totalorder %s23, 7
      %p147 = por %p145, %p146
      %p149 = scmp.ne.s32.totalorder %s132, %s148
      %p150 = scmp.eq.s32.totalorder %s23, 0
      %p151 = por %p149, %p150
      %p152 = scmp.le.s32.totalorder 1, %s17
      %p153 = scmp.lt.s32.totalorder %s17, 9
      %p154 = pnand %p152, %p153
      %p155 = pneg %p154
      // Predicated region
      $region9: #{tpu_custom_call.1} parent=5 // pred_check
        _
      $region10: #{tpu_custom_call.1} parent=5 // pred_check_branch
        %157 = sbr.rel (%p154) target = $region12
      $region11: #{tpu_custom_call.1} parent=5 // pred_region
        %s158 = ssub.s32 %s17, 1
        // Predicated region
        $region13: #{tpu_custom_call.1} parent=11 // pred_check
          %p159 = pneg %p76
        $region14: #{tpu_custom_call.1} parent=11 // pred_check_branch
          %161 = sbr.rel (%p159) target = $region16
        $region15: #{tpu_custom_call.1} parent=11 // pred_region
          %s163 = ssub.s32 24576, 24576
          %164 = vsyncadd [#allocation7], %s163
          %s165 = sshll.u32 [#allocation6], 4
          %s166 = int_to_ptr.vmem [resolvable:$true] %s165
          %171 = dma.hbm_to_vmem [thread:$0]  %s1, 24576, %s166, [#allocation7], 384, 384, 24
        $region16: #{tpu_custom_call.1} parent=11 // pred_fallthru
          _
        // Predicated region
        $region17: #{tpu_custom_call.1} parent=11 // pred_check
          %p172 = pneg %p97
        $region18: #{tpu_custom_call.1} parent=11 // pred_check_branch
          %174 = sbr.rel (%p172) target = $region20
        $region19: #{tpu_custom_call.1} parent=11 // pred_region
          %s176 = ssub.s32 8192, 8192
          %177 = vsyncadd [#allocation7], %s176
          %s178 = sshll.u32 [#allocation8], 4
          %s179 = int_to_ptr.vmem [resolvable:$true] %s178
          %184 = dma.hbm_to_vmem [thread:$0]  %s2, 8192, %s179, [#allocation7], 128, 128, 8
        $region20: #{tpu_custom_call.1} parent=11 // pred_fallthru
          _
        // Predicated region
        $region21: #{tpu_custom_call.1} parent=11 // pred_check
          %p185 = pneg %p118
        $region22: #{tpu_custom_call.1} parent=11 // pred_check_branch
          %187 = sbr.rel (%p185) target = $region24
        $region23: #{tpu_custom_call.1} parent=11 // pred_region
          _
        $region24: #{tpu_custom_call.1} parent=11 // pred_fallthru
          _
      $region12: #{tpu_custom_call.1} parent=5 // pred_fallthru
        _
      %p188 = scmp.lt.s32.totalorder %s17, 8
      // Predicated region
      $region25: #{tpu_custom_call.1} parent=5 // pred_check
        %p189 = pneg %p188
      $region26: #{tpu_custom_call.1} parent=5 // pred_check_branch
        %191 = sbr.rel (%p189) target = $region28
      $region27: #{tpu_custom_call.1} parent=5 // pred_region
        // Predicated region
        $region29: #{tpu_custom_call.1} parent=27 // pred_check
          %p192 = pneg %p49
        $region30: #{tpu_custom_call.1} parent=27 // pred_check_branch
          %194 = sbr.rel (%p192) target = $region32
        $region31: #{tpu_custom_call.1} parent=27 // pred_region
          %s195 = sand.u32 %s39, 1
          %s196 = scalar_lea.sflag [#allocation4], %s195
          %s197 = sand.u32 %s39, 1
          %s198 = smul.addr %s197, 8
          %s199 = scalar_lea.vmem [#allocation3], %s198
          %s201 = ssub.s32 128, 128
          %202 = vsyncadd %s196, %s201
          %s203 = smul.addr %s24, 128
          %s204 = scalar_lea.hbm %s0, %s203
          %s206 = sshll.u32 %s199, 4
          %s207 = int_to_ptr.vmem [resolvable:$true] %s206
          %209 = dma.hbm_to_vmem [thread:$0]  %s204, 128, %s207, %s196
        $region32: #{tpu_custom_call.1} parent=27 // pred_fallthru
          _
      $region28: #{tpu_custom_call.1} parent=5 // pred_fallthru
        _
      %p210 = scmp.le.s32.totalorder 1, %s17
      %p211 = scmp.lt.s32.totalorder %s17, 9
      %p212 = pnand %p210, %p211
      %p213 = pneg %p212
      // Predicated region
      $region33: #{tpu_custom_call.1} parent=5 // pred_check
        _
      $region34: #{tpu_custom_call.1} parent=5 // pred_check_branch
        %215 = sbr.rel (%p212) target = $region36
      $region35: #{tpu_custom_call.1} parent=5 // pred_region
        %s216 = ssub.s32 %s17, 1
        %s217 = sand.u32 %s42, 1
        %s218 = scalar_lea.sflag [#allocation4], %s217
        %s219 = sand.u32 %s42, 1
        %s220 = smul.addr %s219, 8
        %s221 = scalar_lea.vmem [#allocation3], %s220
        // Predicated region
        $region37: #{tpu_custom_call.1} parent=35 // pred_check
          %p222 = pneg %p55
        $region38: #{tpu_custom_call.1} parent=35 // pred_check_branch
          %224 = sbr.rel (%p222) target = $region40
        $region39: #{tpu_custom_call.1} parent=35 // pred_region
          %225 = dma.done %s218, 128
        $region40: #{tpu_custom_call.1} parent=35 // pred_fallthru
          _
        // Predicated region
        $region41: #{tpu_custom_call.1} parent=35 // pred_check
          %p226 = pneg %p76
        $region42: #{tpu_custom_call.1} parent=35 // pred_check_branch
          %228 = sbr.rel (%p226) target = $region44
        $region43: #{tpu_custom_call.1} parent=35 // pred_region
          %229 = dma.done [#allocation7], 24576
        $region44: #{tpu_custom_call.1} parent=35 // pred_fallthru
          _
        // Predicated region
        $region45: #{tpu_custom_call.1} parent=35 // pred_check
          %p230 = pneg %p97
        $region46: #{tpu_custom_call.1} parent=35 // pred_check_branch
          %232 = sbr.rel (%p230) target = $region48
        $region47: #{tpu_custom_call.1} parent=35 // pred_region
          %233 = dma.done [#allocation7], 8192
        $region48: #{tpu_custom_call.1} parent=35 // pred_fallthru
          _
        %s234 = sand.u32 %s42, 1
        %s235 = scalar_lea.sflag [#allocation4], %s234
        %s236 = sand.u32 %s42, 1
        %s237 = smul.addr %s236, 8
        %s238 = scalar_lea.vmem [#allocation3], %s237
        %p239 = pneg %p55
        %p240 = pneg %p52
        %p241 = pneg %p76
        %p242 = pneg %p73
        %p243 = pneg %p97
        %p244 = pneg %p94
        %p245 = pneg %p118
        %p246 = pneg %p115
        %p247 = pneg %p144
        %p248 = pneg %p141
        %s249 = sand.u32 %s131, 1
        %s250 = scalar_lea.sflag [#allocation5], %s249
        %s251 = sand.u32 %s131, 1
        %s252 = smul.addr %s251, 8
        %s253 = scalar_lea.vmem [#allocation9], %s252
        %p254 = scmp.eq.s32.totalorder %s27, 0
        // Predicated region
        $region49: #{tpu_custom_call.1} parent=35 // pred_check
          %p255 = pneg %p254
        $region50: #{tpu_custom_call.1} parent=35 // pred_check_branch
          %257 = sbr.rel (%p255) target = $region52
        $region51: #{tpu_custom_call.1} parent=35 // pred_region
          %258 = vst [vmem:[#allocation2] sm:$0xff] 0.0
        $region52: #{tpu_custom_call.1} parent=35 // pred_fallthru
          _
        %v259 = vld [vmem:[%s221] sm:$0xff]
        %s260 = smul.u32 %s27, 48
        %s261 = smul.addr %s260, 8
        %s262 = scalar_lea.vmem [#allocation6], %s261
        %v263 = vld [vmem:[%s262] sm:$0xff]
        %v264 = vld [vmem:[%s262 + $0x8] sm:$0xff]
        %v265 = vld [vmem:[%s262 + $0x10] sm:$0xff]
        %v266 = vld [vmem:[%s262 + $0x18] sm:$0xff]
        %v267 = vld [vmem:[%s262 + $0x20] sm:$0xff]
        %v268 = vld [vmem:[%s262 + $0x28] sm:$0xff]
        %v269 = vld [vmem:[%s262 + $0x30] sm:$0xff]
        %v270 = vld [vmem:[%s262 + $0x38] sm:$0xff]
        %v271 = vld [vmem:[%s262 + $0x40] sm:$0xff]
        %v272 = vld [vmem:[%s262 + $0x48] sm:$0xff]
        %v273 = vld [vmem:[%s262 + $0x50] sm:$0xff]
        %v274 = vld [vmem:[%s262 + $0x58] sm:$0xff]
        %v275 = vld [vmem:[%s262 + $0x60] sm:$0xff]
        %v276 = vld [vmem:[%s262 + $0x68] sm:$0xff]
        %v277 = vld [vmem:[%s262 + $0x70] sm:$0xff]
        %v278 = vld [vmem:[%s262 + $0x78] sm:$0xff]
        %v279 = vld [vmem:[%s262 + $0x80] sm:$0xff]
        %v280 = vld [vmem:[%s262 + $0x88] sm:$0xff]
        %v281 = vld [vmem:[%s262 + $0x90] sm:$0xff]
        %v282 = vld [vmem:[%s262 + $0x98] sm:$0xff]
        %v283 = vld [vmem:[%s262 + $0xa0] sm:$0xff]
        %v284 = vld [vmem:[%s262 + $0xa8] sm:$0xff]
        %v285 = vld [vmem:[%s262 + $0xb0] sm:$0xff]
        %v286 = vld [vmem:[%s262 + $0xb8] sm:$0xff]
        %v287 = vld [vmem:[%s262 + $0xc0] sm:$0xff]
        %v288 = vld [vmem:[%s262 + $0xc8] sm:$0xff]
        %v289 = vld [vmem:[%s262 + $0xd0] sm:$0xff]
        %v290 = vld [vmem:[%s262 + $0xd8] sm:$0xff]
        %v291 = vld [vmem:[%s262 + $0xe0] sm:$0xff]
        %v292 = vld [vmem:[%s262 + $0xe8] sm:$0xff]
        %v293 = vld [vmem:[%s262 + $0xf0] sm:$0xff]
        %v294 = vld [vmem:[%s262 + $0xf8] sm:$0xff]
        %v295 = vld [vmem:[%s262 + $0x100] sm:$0xff]
        %v296 = vld [vmem:[%s262 + $0x108] sm:$0xff]
        %v297 = vld [vmem:[%s262 + $0x110] sm:$0xff]
        %v298 = vld [vmem:[%s262 + $0x118] sm:$0xff]
        %v299 = vld [vmem:[%s262 + $0x120] sm:$0xff]
        %v300 = vld [vmem:[%s262 + $0x128] sm:$0xff]
        %v301 = vld [vmem:[%s262 + $0x130] sm:$0xff]
        %v302 = vld [vmem:[%s262 + $0x138] sm:$0xff]
        %v303 = vld [vmem:[%s262 + $0x140] sm:$0xff]
        %v304 = vld [vmem:[%s262 + $0x148] sm:$0xff]
        %v305 = vld [vmem:[%s262 + $0x150] sm:$0xff]
        %v306 = vld [vmem:[%s262 + $0x158] sm:$0xff]
        %v307 = vld [vmem:[%s262 + $0x160] sm:$0xff]
        %v308 = vld [vmem:[%s262 + $0x168] sm:$0xff]
        %v309 = vld [vmem:[%s262 + $0x170] sm:$0xff]
        %v310 = vld [vmem:[%s262 + $0x178] sm:$0xff]
        %s311 = smul.u32 %s27, 128
        %s312 = scalar_lea.vmem [#allocation8], %s311
        %v313 = vld [vmem:[%s312] sm:$0xff]
        %v314 = vld [vmem:[%s312 + $0x8] sm:$0xff]
        %v315 = vld [vmem:[%s312 + $0x10] sm:$0xff]
        %v316 = vld [vmem:[%s312 + $0x18] sm:$0xff]
        %v317 = vld [vmem:[%s312 + $0x20] sm:$0xff]
        %v318 = vld [vmem:[%s312 + $0x28] sm:$0xff]
        %v319 = vld [vmem:[%s312 + $0x30] sm:$0xff]
        %v320 = vld [vmem:[%s312 + $0x38] sm:$0xff]
        %v321 = vld [vmem:[%s312 + $0x40] sm:$0xff]
        %v322 = vld [vmem:[%s312 + $0x48] sm:$0xff]
        %v323 = vld [vmem:[%s312 + $0x50] sm:$0xff]
        %v324 = vld [vmem:[%s312 + $0x58] sm:$0xff]
        %v325 = vld [vmem:[%s312 + $0x60] sm:$0xff]
        %v326 = vld [vmem:[%s312 + $0x68] sm:$0xff]
        %v327 = vld [vmem:[%s312 + $0x70] sm:$0xff]
        %v328 = vld [vmem:[%s312 + $0x78] sm:$0xff]
        %329 = vmatprep.subr.mxu0 %v309
        %330 = vmatpush1.msra.mxu0 %v308
        %331 = vmatprep.subr.mxu0 %v306
        %332 = vmatpush1.msra.mxu0 %v305
        %333 = vmatprep.subr.mxu0 %v303
        %334 = vmatpush1.msra.mxu0 %v302
        %335 = vmatprep.subr.mxu0 %v300
        %336 = vmatpush1.msra.mxu0 %v299
        %337 = vmatprep.subr.mxu0 %v297
        %338 = vmatpush1.msra.mxu0 %v296
        %339 = vmatprep.subr.mxu0 %v294
        %340 = vmatpush1.msra.mxu0 %v293
        %341 = vmatprep.subr.mxu0 %v291
        %342 = vmatpush1.msra.mxu0 %v290
        %343 = vmatprep.subr.mxu0 %v288
        %344 = vmatpush1.msra.mxu0 %v287
        %345 = vmatprep.subr.mxu0 %v285
        %346 = vmatpush1.msra.mxu0 %v284
        %347 = vmatprep.subr.mxu0 %v282
        %348 = vmatpush1.msra.mxu0 %v281
        %349 = vmatprep.subr.mxu0 %v279
        %350 = vmatpush1.msra.mxu0 %v278
        %351 = vmatprep.subr.mxu0 %v276
        %352 = vmatpush1.msra.mxu0 %v275
        %353 = vmatprep.subr.mxu0 %v273
        %354 = vmatpush1.msra.mxu0 %v272
        %355 = vmatprep.subr.mxu0 %v270
        %356 = vmatpush1.msra.mxu0 %v269
        %357 = vmatprep.subr.mxu0 %v267
        %358 = vmatpush1.msra.mxu0 %v266
        %359 = vmatprep.subr.mxu0 %v264
        %360 = vmatpush1.msra.mxu0 %v263
        %361 = vmatprep.subr.mxu0 0.0
        %362 = vmatpush2.msra.mxu0 0.0
        %363 = vmatprep.subr.mxu0 0.0
        %364 = vmatpush2.msra.mxu0 0.0
        %365 = vmatprep.subr.mxu0 0.0
        %366 = vmatpush2.msra.mxu0 0.0
        %367 = vmatprep.subr.mxu0 0.0
        %368 = vmatpush2.msra.mxu0 0.0
        %369 = vmatprep.subr.mxu0 0.0
        %370 = vmatpush2.msra.mxu0 0.0
        %371 = vmatprep.subr.mxu0 0.0
        %372 = vmatpush2.msra.mxu0 0.0
        %373 = vmatprep.subr.mxu0 0.0
        %374 = vmatpush2.msra.mxu0 0.0
        %375 = vmatprep.subr.mxu0 0.0
        %376 = vmatpush2.msra.mxu0 0.0
        %377 = vmatprep.subr.mxu0 0.0
        %378 = vmatpush2.msra.mxu0 0.0
        %379 = vmatprep.subr.mxu0 0.0
        %380 = vmatpush2.msra.mxu0 0.0
        %381 = vmatprep.subr.mxu0 0.0
        %382 = vmatpush2.msra.mxu0 0.0
        %383 = vmatprep.subr.mxu0 0.0
        %384 = vmatpush2.msra.mxu0 0.0
        %385 = vmatprep.subr.mxu0 0.0
        %386 = vmatpush2.msra.mxu0 0.0
        %387 = vmatprep.subr.mxu0 0.0
        %388 = vmatpush2.msra.mxu0 0.0
        %389 = vmatprep.subr.mxu0 0.0
        %390 = vmatpush2.msra.mxu0 0.0
        %391 = vmatprep.subr.mxu0 0.0
        %392 = vmatpush2.msra.mxu0 0.0
        %393 = vmatprep.mubr.f32.mxu0 0.0
        %394 = vmatmul.mubr.f32.gmra.mxu0 %v259
        %v395 = vpop.f32.mrf.mxu0
        %v396 = vadd.f32 0.0, %v395
        %v397 = vpop.f32.mrf.mxu0
        %v398 = vadd.f32 0.0, %v397
        %399 = vdwg.mxu0
        %400 = vmatprep.subr.mxu0 0.0
        %401 = vmatpush1.msra.mxu0 %v310
        %402 = vmatprep.subr.mxu0 0.0
        %403 = vmatpush1.msra.mxu0 %v307
        %404 = vmatprep.subr.mxu0 0.0
        %405 = vmatpush1.msra.mxu0 %v304
        %406 = vmatprep.subr.mxu0 0.0
        %407 = vmatpush1.msra.mxu0 %v301
        %408 = vmatprep.subr.mxu0 0.0
        %409 = vmatpush1.msra.mxu0 %v298
        %410 = vmatprep.subr.mxu0 0.0
        %411 = vmatpush1.msra.mxu0 %v295
        %412 = vmatprep.subr.mxu0 0.0
        %413 = vmatpush1.msra.mxu0 %v292
        %414 = vmatprep.subr.mxu0 0.0
        %415 = vmatpush1.msra.mxu0 %v289
        %416 = vmatprep.subr.mxu0 0.0
        %417 = vmatpush1.msra.mxu0 %v286
        %418 = vmatprep.subr.mxu0 0.0
        %419 = vmatpush1.msra.mxu0 %v283
        %420 = vmatprep.subr.mxu0 0.0
        %421 = vmatpush1.msra.mxu0 %v280
        %422 = vmatprep.subr.mxu0 0.0
        %423 = vmatpush1.msra.mxu0 %v277
        %424 = vmatprep.subr.mxu0 0.0
        %425 = vmatpush1.msra.mxu0 %v274
        %426 = vmatprep.subr.mxu0 0.0
        %427 = vmatpush1.msra.mxu0 %v271
        %428 = vmatprep.subr.mxu0 0.0
        %429 = vmatpush1.msra.mxu0 %v268
        %430 = vmatprep.subr.mxu0 0.0
        %431 = vmatpush1.msra.mxu0 %v265
        %432 = vmatprep.subr.mxu0 0.0
        %433 = vmatpush2.msra.mxu0 0.0
        %434 = vmatprep.subr.mxu0 0.0
        %435 = vmatpush2.msra.mxu0 0.0
        %436 = vmatprep.subr.mxu0 0.0
        %437 = vmatpush2.msra.mxu0 0.0
        %438 = vmatprep.subr.mxu0 0.0
        %439 = vmatpush2.msra.mxu0 0.0
        %440 = vmatprep.subr.mxu0 0.0
        %441 = vmatpush2.msra.mxu0 0.0
        %442 = vmatprep.subr.mxu0 0.0
        %443 = vmatpush2.msra.mxu0 0.0
        %444 = vmatprep.subr.mxu0 0.0
        %445 = vmatpush2.msra.mxu0 0.0
        %446 = vmatprep.subr.mxu0 0.0
        %447 = vmatpush2.msra.mxu0 0.0
        %448 = vmatprep.subr.mxu0 0.0
        %449 = vmatpush2.msra.mxu0 0.0
        %450 = vmatprep.subr.mxu0 0.0
        %451 = vmatpush2.msra.mxu0 0.0
        %452 = vmatprep.subr.mxu0 0.0
        %453 = vmatpush2.msra.mxu0 0.0
        %454 = vmatprep.subr.mxu0 0.0
        %455 = vmatpush2.msra.mxu0 0.0
        %456 = vmatprep.subr.mxu0 0.0
        %457 = vmatpush2.msra.mxu0 0.0
        %458 = vmatprep.subr.mxu0 0.0
        %459 = vmatpush2.msra.mxu0 0.0
        %460 = vmatprep.subr.mxu0 0.0
        %461 = vmatpush2.msra.mxu0 0.0
        %462 = vmatprep.subr.mxu0 0.0
        %463 = vmatpush2.msra.mxu0 0.0
        %464 = vmatprep.mubr.f32.mxu0 0.0
        %465 = vmatmul.mubr.f32.gmra.mxu0 %v259
        %v466 = vpop.f32.mrf.mxu0
        %v467 = vadd.f32 0.0, %v466
        %v468 = vpop.f32.mrf.mxu0
        %469 = vdwg.mxu0
        %v470 = vlaneseq
        %v471 = vand.u32 %v470, 127
        %vm472 = vcmp.ge.s32.totalorder %v471, 0
        %vm473 = vcmp.lt.s32.totalorder %v471, 64
        %vm474 = vmand %vm472, %vm473
        %v475 = vsel %vm474, %v396, 0.0
        %476 = vmatprep.subr.mxu0 0.0
        %477 = vmatpush1.xpose.msra.mxu0 0.0
        %478 = vmatprep.subr.mxu0 0.0
        %479 = vmatpush1.xpose.msra.mxu0 0.0
        %480 = vmatprep.subr.mxu0 0.0
        %481 = vmatpush1.xpose.msra.mxu0 0.0
        %482 = vmatprep.subr.mxu0 0.0
        %483 = vmatpush1.xpose.msra.mxu0 0.0
        %484 = vmatprep.subr.mxu0 0.0
        %485 = vmatpush1.xpose.msra.mxu0 0.0
        %486 = vmatprep.subr.mxu0 0.0
        %487 = vmatpush1.xpose.msra.mxu0 0.0
        %488 = vmatprep.subr.mxu0 0.0
        %489 = vmatpush1.xpose.msra.mxu0 0.0
        %490 = vmatprep.subr.mxu0 0.0
        %491 = vmatpush1.xpose.msra.mxu0 0.0
        %492 = vmatprep.subr.mxu0 0.0
        %493 = vmatpush1.xpose.msra.mxu0 0.0
        %494 = vmatprep.subr.mxu0 0.0
        %495 = vmatpush1.xpose.msra.mxu0 0.0
        %496 = vmatprep.subr.mxu0 0.0
        %497 = vmatpush1.xpose.msra.mxu0 0.0
        %498 = vmatprep.subr.mxu0 0.0
        %499 = vmatpush1.xpose.msra.mxu0 0.0
        %500 = vmatprep.subr.mxu0 0.0
        %501 = vmatpush1.xpose.msra.mxu0 0.0
        %502 = vmatprep.subr.mxu0 0.0
        %503 = vmatpush1.xpose.msra.mxu0 0.0
        %504 = vmatprep.subr.mxu0 0.0
        %505 = vmatpush1.xpose.msra.mxu0 0.0
        %506 = vmatprep.subr.mxu0 0.0
        %507 = vmatpush1.xpose.msra.mxu0 %v398
        %508 = vmatprep.subr.mxu0 0.0
        %509 = vmatpush2.xpose.msra.mxu0 0.0
        %510 = vmatprep.subr.mxu0 0.0
        %511 = vmatpush2.xpose.msra.mxu0 0.0
        %512 = vmatprep.subr.mxu0 0.0
        %513 = vmatpush2.xpose.msra.mxu0 0.0
        %514 = vmatprep.subr.mxu0 0.0
        %515 = vmatpush2.xpose.msra.mxu0 0.0
        %516 = vmatprep.subr.mxu0 0.0
        %517 = vmatpush2.xpose.msra.mxu0 0.0
        %518 = vmatprep.subr.mxu0 0.0
        %519 = vmatpush2.xpose.msra.mxu0 0.0
        %520 = vmatprep.subr.mxu0 0.0
        %521 = vmatpush2.xpose.msra.mxu0 0.0
        %522 = vmatprep.subr.mxu0 0.0
        %523 = vmatpush2.xpose.msra.mxu0 0.0
        %524 = vmatprep.subr.mxu0 0.0
        %525 = vmatpush2.xpose.msra.mxu0 0.0
        %526 = vmatprep.subr.mxu0 0.0
        %527 = vmatpush2.xpose.msra.mxu0 0.0
        %528 = vmatprep.subr.mxu0 0.0
        %529 = vmatpush2.xpose.msra.mxu0 0.0
        %530 = vmatprep.subr.mxu0 0.0
        %531 = vmatpush2.xpose.msra.mxu0 0.0
        %532 = vmatprep.subr.mxu0 0.0
        %533 = vmatpush2.xpose.msra.mxu0 0.0
        %534 = vmatprep.subr.mxu0 0.0
        %535 = vmatpush2.xpose.msra.mxu0 0.0
        %536 = vmatprep.subr.mxu0 0.0
        %537 = vmatpush2.xpose.msra.mxu0 0.0
        %538 = vmatprep.subr.mxu0 0.0
        %539 = vmatpush2.xpose.msra.mxu0 0.0
        %540 = vmatprep.mubr.f32.mxu0 0.0
        %541 = vmatmul.mubr.f32.gmra.mxu0 %v475
        %v542 = vpop.f32.mrf.mxu0
        %v543 = vadd.f32 0.0, %v542
        %v544 = vpop.f32.mrf.mxu0
        %545 = vdwg.mxu0
        %vm546 = vcmask 64512
        %v547 = vsel %vm546, %v543, -inf
        %548 = vmax.xlane.f32.xlu0 %v547
        %v549 = vpop.xlane.xlu0 %548
        %v550 = vsub.f32 %v543, %v549
        %v551 = vmul.f32 %v550, 1.442695
        %v552 = vpow.pop %v551
        %v553 = vsel %vm546, %v552, 0.0
        %554 = vadd.xlane.f32.xlu0 %v553
        %v555 = vpop.xlane.xlu0 %554
        %v556 = vrcp.pop %v555
        %v557 = vmul.f32 1.0, %v556
        %v559 = vsel %vm546, %v552, 0
        %561 = vmatprep.subr.mxu0 0.0
        %562 = vmatpush1.msra.mxu0 0.0
        %563 = vmatprep.subr.mxu0 0.0
        %564 = vmatpush1.msra.mxu0 0.0
        %565 = vmatprep.subr.mxu0 0.0
        %566 = vmatpush1.msra.mxu0 0.0
        %567 = vmatprep.subr.mxu0 0.0
        %568 = vmatpush1.msra.mxu0 0.0
        %569 = vmatprep.subr.mxu0 0.0
        %570 = vmatpush1.msra.mxu0 0.0
        %571 = vmatprep.subr.mxu0 0.0
        %572 = vmatpush1.msra.mxu0 0.0
        %573 = vmatprep.subr.mxu0 0.0
        %574 = vmatpush1.msra.mxu0 0.0
        %575 = vmatprep.subr.mxu0 0.0
        %576 = vmatpush1.msra.mxu0 0.0
        %577 = vmatprep.subr.mxu0 0.0
        %578 = vmatpush1.msra.mxu0 0.0
        %579 = vmatprep.subr.mxu0 0.0
        %580 = vmatpush1.msra.mxu0 0.0
        %581 = vmatprep.subr.mxu0 0.0
        %582 = vmatpush1.msra.mxu0 0.0
        %583 = vmatprep.subr.mxu0 0.0
        %584 = vmatpush1.msra.mxu0 0.0
        %585 = vmatprep.subr.mxu0 0.0
        %586 = vmatpush1.msra.mxu0 0.0
        %587 = vmatprep.subr.mxu0 0.0
        %588 = vmatpush1.msra.mxu0 0.0
        %589 = vmatprep.subr.mxu0 0.0
        %590 = vmatpush1.msra.mxu0 0.0
        %591 = vmatprep.subr.mxu0 0.0
        %592 = vmatpush1.msra.mxu0 %v467
        %593 = vmatprep.subr.mxu0 0.0
        %594 = vmatpush2.msra.mxu0 0.0
        %595 = vmatprep.subr.mxu0 0.0
        %596 = vmatpush2.msra.mxu0 0.0
        %597 = vmatprep.subr.mxu0 0.0
        %598 = vmatpush2.msra.mxu0 0.0
        %599 = vmatprep.subr.mxu0 0.0
        %600 = vmatpush2.msra.mxu0 0.0
        %601 = vmatprep.subr.mxu0 0.0
        %602 = vmatpush2.msra.mxu0 0.0
        %603 = vmatprep.subr.mxu0 0.0
        %604 = vmatpush2.msra.mxu0 0.0
        %605 = vmatprep.subr.mxu0 0.0
        %606 = vmatpush2.msra.mxu0 0.0
        %607 = vmatprep.subr.mxu0 0.0
        %608 = vmatpush2.msra.mxu0 0.0
        %609 = vmatprep.subr.mxu0 0.0
        %610 = vmatpush2.msra.mxu0 0.0
        %611 = vmatprep.subr.mxu0 0.0
        %612 = vmatpush2.msra.mxu0 0.0
        %613 = vmatprep.subr.mxu0 0.0
        %614 = vmatpush2.msra.mxu0 0.0
        %615 = vmatprep.subr.mxu0 0.0
        %616 = vmatpush2.msra.mxu0 0.0
        %617 = vmatprep.subr.mxu0 0.0
        %618 = vmatpush2.msra.mxu0 0.0
        %619 = vmatprep.subr.mxu0 0.0
        %620 = vmatpush2.msra.mxu0 0.0
        %621 = vmatprep.subr.mxu0 0.0
        %622 = vmatpush2.msra.mxu0 0.0
        %623 = vmatprep.subr.mxu0 0.0
        %624 = vmatpush2.msra.mxu0 0.0
        %625 = vmatprep.mubr.f32.mxu0 0.0
        %626 = vmatmul.mubr.f32.gmra.mxu0 %v559
        %v627 = vpop.f32.mrf.mxu0
        %v628 = vadd.f32 0.0, %v627
        %v629 = vpop.f32.mrf.mxu0
        %630 = vdwg.mxu0
        %v631 = vmul.f32 %v628, %v557
        %v632 = vsel %vm474, %v631, 0.0
        %v633 = vadd.f32 %v632, 0.0
        %vm634 = vcmp.ge.s32.totalorder %v471, 64
        %vm635 = vcmp.lt.s32.totalorder %v471, 128
        %vm636 = vmand %vm634, %vm635
        %v637 = vsel %vm636, %v396, 0.0
        %638 = vmatprep.subr.mxu0 0.0
        %639 = vmatpush1.xpose.msra.mxu0 0.0
        %640 = vmatprep.subr.mxu0 0.0
        %641 = vmatpush1.xpose.msra.mxu0 0.0
        %642 = vmatprep.subr.mxu0 0.0
        %643 = vmatpush1.xpose.msra.mxu0 0.0
        %644 = vmatprep.subr.mxu0 0.0
        %645 = vmatpush1.xpose.msra.mxu0 0.0
        %646 = vmatprep.subr.mxu0 0.0
        %647 = vmatpush1.xpose.msra.mxu0 0.0
        %648 = vmatprep.subr.mxu0 0.0
        %649 = vmatpush1.xpose.msra.mxu0 0.0
        %650 = vmatprep.subr.mxu0 0.0
        %651 = vmatpush1.xpose.msra.mxu0 0.0
        %652 = vmatprep.subr.mxu0 0.0
        %653 = vmatpush1.xpose.msra.mxu0 0.0
        %654 = vmatprep.subr.mxu0 0.0
        %655 = vmatpush1.xpose.msra.mxu0 0.0
        %656 = vmatprep.subr.mxu0 0.0
        %657 = vmatpush1.xpose.msra.mxu0 0.0
        %658 = vmatprep.subr.mxu0 0.0
        %659 = vmatpush1.xpose.msra.mxu0 0.0
        %660 = vmatprep.subr.mxu0 0.0
        %661 = vmatpush1.xpose.msra.mxu0 0.0
        %662 = vmatprep.subr.mxu0 0.0
        %663 = vmatpush1.xpose.msra.mxu0 0.0
        %664 = vmatprep.subr.mxu0 0.0
        %665 = vmatpush1.xpose.msra.mxu0 0.0
        %666 = vmatprep.subr.mxu0 0.0
        %667 = vmatpush1.xpose.msra.mxu0 0.0
        %668 = vmatprep.subr.mxu0 0.0
        %669 = vmatpush1.xpose.msra.mxu0 %v398
        %670 = vmatprep.subr.mxu0 0.0
        %671 = vmatpush2.xpose.msra.mxu0 0.0
        %672 = vmatprep.subr.mxu0 0.0
        %673 = vmatpush2.xpose.msra.mxu0 0.0
        %674 = vmatprep.subr.mxu0 0.0
        %675 = vmatpush2.xpose.msra.mxu0 0.0
        %676 = vmatprep.subr.mxu0 0.0
        %677 = vmatpush2.xpose.msra.mxu0 0.0
        %678 = vmatprep.subr.mxu0 0.0
        %679 = vmatpush2.xpose.msra.mxu0 0.0
        %680 = vmatprep.subr.mxu0 0.0
        %681 = vmatpush2.xpose.msra.mxu0 0.0
        %682 = vmatprep.subr.mxu0 0.0
        %683 = vmatpush2.xpose.msra.mxu0 0.0
        %684 = vmatprep.subr.mxu0 0.0
        %685 = vmatpush2.xpose.msra.mxu0 0.0
        %686 = vmatprep.subr.mxu0 0.0
        %687 = vmatpush2.xpose.msra.mxu0 0.0
        %688 = vmatprep.subr.mxu0 0.0
        %689 = vmatpush2.xpose.msra.mxu0 0.0
        %690 = vmatprep.subr.mxu0 0.0
        %691 = vmatpush2.xpose.msra.mxu0 0.0
        %692 = vmatprep.subr.mxu0 0.0
        %693 = vmatpush2.xpose.msra.mxu0 0.0
        %694 = vmatprep.subr.mxu0 0.0
        %695 = vmatpush2.xpose.msra.mxu0 0.0
        %696 = vmatprep.subr.mxu0 0.0
        %697 = vmatpush2.xpose.msra.mxu0 0.0
        %698 = vmatprep.subr.mxu0 0.0
        %699 = vmatpush2.xpose.msra.mxu0 0.0
        %700 = vmatprep.subr.mxu0 0.0
        %701 = vmatpush2.xpose.msra.mxu0 0.0
        %702 = vmatprep.mubr.f32.mxu0 0.0
        %703 = vmatmul.mubr.f32.gmra.mxu0 %v637
        %v704 = vpop.f32.mrf.mxu0
        %v705 = vadd.f32 0.0, %v704
        %v706 = vpop.f32.mrf.mxu0
        %707 = vdwg.mxu0
        %v708 = vsel %vm546, %v705, -inf
        %709 = vmax.xlane.f32.xlu0 %v708
        %v710 = vpop.xlane.xlu0 %709
        %v711 = vsub.f32 %v705, %v710
        %v712 = vmul.f32 %v711, 1.442695
        %v713 = vpow.pop %v712
        %v714 = vsel %vm546, %v713, 0.0
        %715 = vadd.xlane.f32.xlu0 %v714
        %v716 = vpop.xlane.xlu0 %715
        %v717 = vrcp.pop %v716
        %v718 = vmul.f32 1.0, %v717
        %v720 = vsel %vm546, %v713, 0
        %722 = vmatprep.subr.mxu0 0.0
        %723 = vmatpush1.msra.mxu0 0.0
        %724 = vmatprep.subr.mxu0 0.0
        %725 = vmatpush1.msra.mxu0 0.0
        %726 = vmatprep.subr.mxu0 0.0
        %727 = vmatpush1.msra.mxu0 0.0
        %728 = vmatprep.subr.mxu0 0.0
        %729 = vmatpush1.msra.mxu0 0.0
        %730 = vmatprep.subr.mxu0 0.0
        %731 = vmatpush1.msra.mxu0 0.0
        %732 = vmatprep.subr.mxu0 0.0
        %733 = vmatpush1.msra.mxu0 0.0
        %734 = vmatprep.subr.mxu0 0.0
        %735 = vmatpush1.msra.mxu0 0.0
        %736 = vmatprep.subr.mxu0 0.0
        %737 = vmatpush1.msra.mxu0 0.0
        %738 = vmatprep.subr.mxu0 0.0
        %739 = vmatpush1.msra.mxu0 0.0
        %740 = vmatprep.subr.mxu0 0.0
        %741 = vmatpush1.msra.mxu0 0.0
        %742 = vmatprep.subr.mxu0 0.0
        %743 = vmatpush1.msra.mxu0 0.0
        %744 = vmatprep.subr.mxu0 0.0
        %745 = vmatpush1.msra.mxu0 0.0
        %746 = vmatprep.subr.mxu0 0.0
        %747 = vmatpush1.msra.mxu0 0.0
        %748 = vmatprep.subr.mxu0 0.0
        %749 = vmatpush1.msra.mxu0 0.0
        %750 = vmatprep.subr.mxu0 0.0
        %751 = vmatpush1.msra.mxu0 0.0
        %752 = vmatprep.subr.mxu0 0.0
        %753 = vmatpush1.msra.mxu0 %v467
        %754 = vmatprep.subr.mxu0 0.0
        %755 = vmatpush2.msra.mxu0 0.0
        %756 = vmatprep.subr.mxu0 0.0
        %757 = vmatpush2.msra.mxu0 0.0
        %758 = vmatprep.subr.mxu0 0.0
        %759 = vmatpush2.msra.mxu0 0.0
        %760 = vmatprep.subr.mxu0 0.0
        %761 = vmatpush2.msra.mxu0 0.0
        %762 = vmatprep.subr.mxu0 0.0
        %763 = vmatpush2.msra.mxu0 0.0
        %764 = vmatprep.subr.mxu0 0.0
        %765 = vmatpush2.msra.mxu0 0.0
        %766 = vmatprep.subr.mxu0 0.0
        %767 = vmatpush2.msra.mxu0 0.0
        %768 = vmatprep.subr.mxu0 0.0
        %769 = vmatpush2.msra.mxu0 0.0
        %770 = vmatprep.subr.mxu0 0.0
        %771 = vmatpush2.msra.mxu0 0.0
        %772 = vmatprep.subr.mxu0 0.0
        %773 = vmatpush2.msra.mxu0 0.0
        %774 = vmatprep.subr.mxu0 0.0
        %775 = vmatpush2.msra.mxu0 0.0
        %776 = vmatprep.subr.mxu0 0.0
        %777 = vmatpush2.msra.mxu0 0.0
        %778 = vmatprep.subr.mxu0 0.0
        %779 = vmatpush2.msra.mxu0 0.0
        %780 = vmatprep.subr.mxu0 0.0
        %781 = vmatpush2.msra.mxu0 0.0
        %782 = vmatprep.subr.mxu0 0.0
        %783 = vmatpush2.msra.mxu0 0.0
        %784 = vmatprep.subr.mxu0 0.0
        %785 = vmatpush2.msra.mxu0 0.0
        %786 = vmatprep.mubr.f32.mxu0 0.0
        %787 = vmatmul.mubr.f32.gmra.mxu0 %v720
        %v788 = vpop.f32.mrf.mxu0
        %v789 = vadd.f32 0.0, %v788
        %v790 = vpop.f32.mrf.mxu0
        %791 = vdwg.mxu0
        %v792 = vmul.f32 %v789, %v718
        %v793 = vsel %vm636, %v792, 0.0
        %v794 = vadd.f32 %v633, %v793
        %v795 = vld [vmem:[#allocation2] sm:$0xff]
        %796 = vmatprep.subr.mxu0 0.0
        %797 = vmatpush1.msra.mxu0 %v328
        %798 = vmatprep.subr.mxu0 0.0
        %799 = vmatpush1.msra.mxu0 %v327
        %800 = vmatprep.subr.mxu0 0.0
        %801 = vmatpush1.msra.mxu0 %v326
        %802 = vmatprep.subr.mxu0 0.0
        %803 = vmatpush1.msra.mxu0 %v325
        %804 = vmatprep.subr.mxu0 0.0
        %805 = vmatpush1.msra.mxu0 %v324
        %806 = vmatprep.subr.mxu0 0.0
        %807 = vmatpush1.msra.mxu0 %v323
        %808 = vmatprep.subr.mxu0 0.0
        %809 = vmatpush1.msra.mxu0 %v322
        %810 = vmatprep.subr.mxu0 0.0
        %811 = vmatpush1.msra.mxu0 %v321
        %812 = vmatprep.subr.mxu0 0.0
        %813 = vmatpush1.msra.mxu0 %v320
        %814 = vmatprep.subr.mxu0 0.0
        %815 = vmatpush1.msra.mxu0 %v319
        %816 = vmatprep.subr.mxu0 0.0
        %817 = vmatpush1.msra.mxu0 %v318
        %818 = vmatprep.subr.mxu0 0.0
        %819 = vmatpush1.msra.mxu0 %v317
        %820 = vmatprep.subr.mxu0 0.0
        %821 = vmatpush1.msra.mxu0 %v316
        %822 = vmatprep.subr.mxu0 0.0
        %823 = vmatpush1.msra.mxu0 %v315
        %824 = vmatprep.subr.mxu0 0.0
        %825 = vmatpush1.msra.mxu0 %v314
        %826 = vmatprep.subr.mxu0 0.0
        %827 = vmatpush1.msra.mxu0 %v313
        %828 = vmatprep.subr.mxu0 0.0
        %829 = vmatpush2.msra.mxu0 0.0
        %830 = vmatprep.subr.mxu0 0.0
        %831 = vmatpush2.msra.mxu0 0.0
        %832 = vmatprep.subr.mxu0 0.0
        %833 = vmatpush2.msra.mxu0 0.0
        %834 = vmatprep.subr.mxu0 0.0
        %835 = vmatpush2.msra.mxu0 0.0
        %836 = vmatprep.subr.mxu0 0.0
        %837 = vmatpush2.msra.mxu0 0.0
        %838 = vmatprep.subr.mxu0 0.0
        %839 = vmatpush2.msra.mxu0 0.0
        %840 = vmatprep.subr.mxu0 0.0
        %841 = vmatpush2.msra.mxu0 0.0
        %842 = vmatprep.subr.mxu0 0.0
        %843 = vmatpush2.msra.mxu0 0.0
        %844 = vmatprep.subr.mxu0 0.0
        %845 = vmatpush2.msra.mxu0 0.0
        %846 = vmatprep.subr.mxu0 0.0
        %847 = vmatpush2.msra.mxu0 0.0
        %848 = vmatprep.subr.mxu0 0.0
        %849 = vmatpush2.msra.mxu0 0.0
        %850 = vmatprep.subr.mxu0 0.0
        %851 = vmatpush2.msra.mxu0 0.0
        %852 = vmatprep.subr.mxu0 0.0
        %853 = vmatpush2.msra.mxu0 0.0
        %854 = vmatprep.subr.mxu0 0.0
        %855 = vmatpush2.msra.mxu0 0.0
        %856 = vmatprep.subr.mxu0 0.0
        %857 = vmatpush2.msra.mxu0 0.0
        %858 = vmatprep.subr.mxu0 0.0
        %859 = vmatpush2.msra.mxu0 0.0
        %860 = vmatprep.mubr.f32.mxu0 0.0
        %861 = vmatmul.mubr.f32.gmra.mxu0 %v794
        %v862 = vpop.f32.mrf.mxu0
        %v863 = vadd.f32 0.0, %v862
        %v864 = vpop.f32.mrf.mxu0
        %865 = vdwg.mxu0
        %v866 = vadd.f32 %v795, %v863
        %867 = vst [vmem:[#allocation2] sm:$0xff] %v866
        %p868 = scmp.eq.s32.totalorder %s27, 3
        // Predicated region
        $region53: #{tpu_custom_call.1} parent=35 // pred_check
          %p869 = pneg %p868
        $region54: #{tpu_custom_call.1} parent=35 // pred_check_branch
          %871 = sbr.rel (%p869) target = $region56
        $region55: #{tpu_custom_call.1} parent=35 // pred_region
          %v872 = vld [vmem:[#allocation2] sm:$0xff]
          %v873 = vld [vmem:[%s3] sm:$0x1]
          %v875 = vlaneseq
          %v876 = vshrl.u32 %v875, 7
          %v877 = vsub.s32 0, %v876
          %v878 = vrot.slane %v873, %v877
          %v880 = vadd.f32 %v872, %v878
          %881 = vst [vmem:[%s253] sm:$0xff] %v880
        $region56: #{tpu_custom_call.1} parent=35 // pred_fallthru
          _
        %s882 = sand.u32 %s131, 1
        %s883 = scalar_lea.sflag [#allocation5], %s882
        %s884 = sand.u32 %s131, 1
        %s885 = smul.addr %s884, 8
        %s886 = scalar_lea.vmem [#allocation9], %s885
        // Predicated region
        $region57: #{tpu_custom_call.1} parent=35 // pred_check
          %p887 = pneg %p141
        $region58: #{tpu_custom_call.1} parent=35 // pred_check_branch
          %889 = sbr.rel (%p887) target = $region60
        $region59: #{tpu_custom_call.1} parent=35 // pred_region
          %s891 = ssub.s32 128, 128
          %892 = vsyncadd %s883, %s891
          %s893 = smul.addr %s26, 128
          %s894 = scalar_lea.hbm %s4, %s893
          %s896 = sshll.u32 %s886, 4
          %s897 = int_to_ptr.vmem [resolvable:$true] %s896
          %899 = dma.vmem_to_hbm [thread:$0]  %s897, 128, %s894, %s883
        $region60: #{tpu_custom_call.1} parent=35 // pred_fallthru
          _
      $region36: #{tpu_custom_call.1} parent=5 // pred_fallthru
        _
      %p900 = scmp.le.s32.totalorder 2, %s17
      // Predicated region
      $region61: #{tpu_custom_call.1} parent=5 // pred_check
        %p901 = pneg %p900
      $region62: #{tpu_custom_call.1} parent=5 // pred_check_branch
        %903 = sbr.rel (%p901) target = $region64
      $region63: #{tpu_custom_call.1} parent=5 // pred_region
        %s904 = ssub.s32 %s17, 2
        // Predicated region
        $region65: #{tpu_custom_call.1} parent=63 // pred_check
          %p905 = pneg %p147
        $region66: #{tpu_custom_call.1} parent=63 // pred_check_branch
          %907 = sbr.rel (%p905) target = $region68
        $region67: #{tpu_custom_call.1} parent=63 // pred_region
          %s908 = sand.u32 %s132, 1
          %s909 = scalar_lea.sflag [#allocation5], %s908
          %s910 = sand.u32 %s132, 1
          %s911 = smul.addr %s910, 8
          %s912 = scalar_lea.vmem [#allocation9], %s911
          %913 = dma.done %s909, 128
        $region68: #{tpu_custom_call.1} parent=63 // pred_fallthru
          _
      $region64: #{tpu_custom_call.1} parent=5 // pred_fallthru
        _
    $region6: #{tpu_custom_call.1} parent=1 // loop_footer
      %s21 = sadd.s32 1, %s17
    $region7: #{tpu_custom_call.1} parent=1 // loop_footer_branch
      %16 = sbr.rel target = $region3
    $region8: #{tpu_custom_call.1} parent=1 // loop_exit
      _
    %914 = vsyncpa [#allocation4], 1
    %s915 = scalar_lea.sflag [#allocation4], 1
    %916 = vsyncpa %s915, 1
    %917 = vsyncpa [#allocation7], 1
    %918 = vsyncpa [#allocation5], 1
    %s919 = scalar_lea.sflag [#allocation5], 1
    %920 = vsyncpa %s919, 1

</llo_original>
